<compile_context>
chip_gen: v5e
topology: v5e:2x2
jax: 0.10.0
libtpu: 0.0.40
codegen_flags: <defaults>
</compile_context>

<pallas_src>
import jax
import jax.numpy as jnp
from jax import lax
from jax.experimental import pallas as pl
from jax.experimental.pallas import tpu as pltpu

NUM_HEADS = 1
DROPOUT_P = 0.1
SCALE = float((NUM_HEADS * NUM_HEADS) ** 0.5)  # == 1.0 for num_heads=1


def _flash_attn_dropout_kernel(x1_ref, x2_ref, x3_ref, keep_ref, o_ref,
                               m_sc, l_sc, acc_sc):
    ki = pl.program_id(2)

    @pl.when(ki == 0)
    def _():
        m_sc[...] = jnp.full_like(m_sc, -jnp.inf)
        l_sc[...] = jnp.zeros_like(l_sc)
        acc_sc[...] = jnp.zeros_like(acc_sc)

    q = x1_ref[0]        # (tq, D) f32  (scale already folded in by the wrapper)
    k = x2_ref[0]        # (tk, D) f32
    v = x3_ref[0]        # (tk, E) f32
    keep = keep_ref[0]   # (tq, tk) f32 in {0, 1}

    # scores = q @ k^T, contracting on D directly (feeds MXU without a transpose)
    s = lax.dot_general(q, k, dimension_numbers=(((1,), (1,)), ((), ())),
                        preferred_element_type=jnp.float32)        # (tq, tk)

    # online softmax
    m_prev = m_sc[...]
    m_new = jnp.maximum(m_prev, jnp.max(s, axis=-1, keepdims=True))
    alpha = jnp.exp(m_prev - m_new)
    p = jnp.exp(s - m_new)                                          # (tq, tk)

    l_sc[...] = alpha * l_sc[...] + jnp.sum(p, axis=-1, keepdims=True)
    # dropout: zero dropped probs here; the 1/(1-p) rescale is folded into the
    # final per-row normalization (one (tq,1) multiply instead of O(tq*tk)).
    acc_sc[...] = alpha * acc_sc[...] + jnp.dot(
        p * keep, v, preferred_element_type=jnp.float32)
    m_sc[...] = m_new

    @pl.when(ki == pl.num_programs(2) - 1)
    def _():
        inv = (1.0 / l_sc[...]) * (1.0 / (1.0 - DROPOUT_P))
        o_ref[0] = (acc_sc[...] * inv).astype(o_ref.dtype)


def _pick_tile(dim, target):
    # Largest clean tile: use `target` when it divides `dim`, else the full dim
    # (full-dim blocks always satisfy the (8,128) BlockSpec constraint).
    if dim <= target or dim % target != 0:
        return dim
    return target


def attention_forward(x1, x2, x3, dropout_key):
    B, M, D = x1.shape
    _, N, D2 = x2.shape
    _, N2, E = x3.shape
    assert D == D2 and N == N2

    # Fold the attention scale into q once (off the O(M*N) path). SCALE == 1.0
    # for num_heads=1, so this is a no-op here.
    if SCALE != 1.0:
        x1 = x1 * SCALE

    # F.dropout default is training=True: keep each prob w.p. (1-p).
    keep = jax.random.bernoulli(
        dropout_key, p=1.0 - DROPOUT_P, shape=(B, M, N)).astype(jnp.float32)

    tq = _pick_tile(M, 128)   # q-tile
    tk = _pick_tile(N, 512)   # kv-tile (reduction axis)
    grid = (B, M // tq, N // tk)

    return pl.pallas_call(
        _flash_attn_dropout_kernel,
        out_shape=jax.ShapeDtypeStruct((B, M, E), jnp.float32),
        grid=grid,
        in_specs=[
            pl.BlockSpec((1, tq, D), lambda b, qi, ki: (b, qi, 0)),
            pl.BlockSpec((1, tk, D), lambda b, qi, ki: (b, ki, 0)),
            pl.BlockSpec((1, tk, E), lambda b, qi, ki: (b, ki, 0)),
            pl.BlockSpec((1, tq, tk), lambda b, qi, ki: (b, qi, ki)),
        ],
        out_specs=pl.BlockSpec((1, tq, E), lambda b, qi, ki: (b, qi, 0)),
        scratch_shapes=[
            pltpu.VMEM((tq, 1), jnp.float32),   # running max m_i
            pltpu.VMEM((tq, 1), jnp.float32),   # running denom l_i
            pltpu.VMEM((tq, E), jnp.float32),   # output accumulator
        ],
        compiler_params=pltpu.CompilerParams(
            dimension_semantics=("parallel", "parallel", "arbitrary"),
            vmem_limit_bytes=48 * 1024 * 1024,  # safe on v7x (64 MiB), ample on v5e/v6e
        ),
    )(x1, x2, x3, keep)


if __name__ == "__main__":
    # Small, self-consistent shapes implied by the forward pass
    # (the spec's literal shapes x1:(2,4,5) vs x2:(2,4,10) cannot matmul):
    # x1:(B,M,D) @ x2:(B,N,D)^T -> (B,M,N); softmax/dropout; @ x3:(B,N,E) -> (B,M,E)
    B, M, N, D, E = 2, 4, 4, 8, 16
    key = jax.random.PRNGKey(0)
    k1, k2, k3, kd = jax.random.split(key, 4)
    x1 = jax.random.normal(k1, (B, M, D), dtype=jnp.float32)
    x2 = jax.random.normal(k2, (B, N, D), dtype=jnp.float32)
    x3 = jax.random.normal(k3, (B, N, E), dtype=jnp.float32)

    out = attention_forward(x1, x2, x3, kd)
    jax.block_until_ready(out)
    assert out.shape == (B, M, E)
    assert bool(jnp.all(jnp.isfinite(out)))
    print("KERNEL_OK")
</pallas_src>

<mosaic_0001>
module attributes {stable_mosaic.version = 11 : i64} {
  func.func @_flash_attn_dropout_kernel(%arg0: i32, %arg1: i32, %arg2: i32, %arg3: memref<1x4x8xf32, #tpu.memory_space<vmem>>, %arg4: memref<1x4x8xf32, #tpu.memory_space<vmem>>, %arg5: memref<1x4x16xf32, #tpu.memory_space<vmem>>, %arg6: memref<1x4x4xf32, #tpu.memory_space<vmem>>, %arg7: memref<1x4x16xf32, #tpu.memory_space<vmem>>, %arg8: memref<4x1xf32, #tpu.memory_space<vmem>>, %arg9: memref<4x1xf32, #tpu.memory_space<vmem>>, %arg10: memref<4x16xf32, #tpu.memory_space<vmem>>) attributes {dimension_semantics = [#tpu.dimension_semantics<parallel>, #tpu.dimension_semantics<parallel>, #tpu.dimension_semantics<arbitrary>], iteration_bounds = array<i64: 2, 1, 1>, scalar_prefetch = 0 : i64, scratch_operands = 3 : i64, tpu.core_type = #tpu.core_type<tc>, window_params = [{transform_indices = @transform_0, window_bounds = array<i64: 1, 4, 8>}, {transform_indices = @transform_1, window_bounds = array<i64: 1, 4, 8>}, {transform_indices = @transform_2, window_bounds = array<i64: 1, 4, 16>}, {transform_indices = @transform_3, window_bounds = array<i64: 1, 4, 4>}, {transform_indices = @transform_4, window_bounds = array<i64: 1, 4, 16>}]} {
    %c0_i32 = arith.constant 0 : i32
    %0 = arith.cmpi eq, %arg2, %c0_i32 : i32
    %1 = arith.extui %0 : i1 to i32
    %c0_i32_0 = arith.constant 0 : i32
    %2 = arith.cmpi ne, %1, %c0_i32_0 : i32
    scf.if %2 {
      %cst_29 = arith.constant 0xFF800000 : f32
      %38 = vector.broadcast %cst_29 : f32 to vector<4x1xf32>
      %c0_30 = arith.constant 0 : index
      %c0_31 = arith.constant 0 : index
      %39 = vector.load %arg8[%c0_30, %c0_31] : memref<4x1xf32, #tpu.memory_space<vmem>>, vector<4x1xf32>
      tpu.vector_store %arg8[%c0_30, %c0_31], %38 {strides = array<i32>} : memref<4x1xf32, #tpu.memory_space<vmem>>, vector<4x1xf32>,
      %cst_32 = arith.constant 0.000000e+00 : f32
      %40 = vector.broadcast %cst_32 : f32 to vector<4x1xf32>
      %c0_33 = arith.constant 0 : index
      %c0_34 = arith.constant 0 : index
      %41 = vector.load %arg9[%c0_33, %c0_34] : memref<4x1xf32, #tpu.memory_space<vmem>>, vector<4x1xf32>
      tpu.vector_store %arg9[%c0_33, %c0_34], %40 {strides = array<i32>} : memref<4x1xf32, #tpu.memory_space<vmem>>, vector<4x1xf32>,
      %cst_35 = arith.constant 0.000000e+00 : f32
      %42 = vector.broadcast %cst_35 : f32 to vector<4x16xf32>
      %c0_36 = arith.constant 0 : index
      %c0_37 = arith.constant 0 : index
      %43 = vector.load %arg10[%c0_36, %c0_37] : memref<4x16xf32, #tpu.memory_space<vmem>>, vector<4x16xf32>
      tpu.vector_store %arg10[%c0_36, %c0_37], %42 {strides = array<i32>} : memref<4x16xf32, #tpu.memory_space<vmem>>, vector<4x16xf32>,
    } else {
    }
    %c0 = arith.constant 0 : index
    %c0_1 = arith.constant 0 : index
    %c0_2 = arith.constant 0 : index
    %3 = vector.load %arg3[%c0, %c0_1, %c0_2] : memref<1x4x8xf32, #tpu.memory_space<vmem>>, vector<1x4x8xf32>
    %4 = vector.shape_cast %3 : vector<1x4x8xf32> to vector<4x8xf32>
    %c0_3 = arith.constant 0 : index
    %c0_4 = arith.constant 0 : index
    %c0_5 = arith.constant 0 : index
    %5 = vector.load %arg4[%c0_3, %c0_4, %c0_5] : memref<1x4x8xf32, #tpu.memory_space<vmem>>, vector<1x4x8xf32>
    %6 = vector.shape_cast %5 : vector<1x4x8xf32> to vector<4x8xf32>
    %c0_6 = arith.constant 0 : index
    %c0_7 = arith.constant 0 : index
    %c0_8 = arith.constant 0 : index
    %7 = vector.load %arg5[%c0_6, %c0_7, %c0_8] : memref<1x4x16xf32, #tpu.memory_space<vmem>>, vector<1x4x16xf32>
    %8 = vector.shape_cast %7 : vector<1x4x16xf32> to vector<4x16xf32>
    %c0_9 = arith.constant 0 : index
    %c0_10 = arith.constant 0 : index
    %c0_11 = arith.constant 0 : index
    %9 = vector.load %arg6[%c0_9, %c0_10, %c0_11] : memref<1x4x4xf32, #tpu.memory_space<vmem>>, vector<1x4x4xf32>
    %10 = vector.shape_cast %9 : vector<1x4x4xf32> to vector<4x4xf32>
    %cst = arith.constant dense<0.000000e+00> : vector<4x4xf32>
    %11 = tpu.matmul %4, %6, %cst {dimension_numbers = #tpu.dot_dimension_numbers<[1], [1], [0], [0], [0, 0, 1, 0], [], []>} : vector<4x8xf32>, vector<4x8xf32>, vector<4x4xf32> -> vector<4x4xf32>
    %c0_12 = arith.constant 0 : index
    %c0_13 = arith.constant 0 : index
    %12 = vector.load %arg8[%c0_12, %c0_13] : memref<4x1xf32, #tpu.memory_space<vmem>>, vector<4x1xf32>
    %cst_14 = arith.constant dense<0xFF800000> : vector<4xf32>
    %13 = vector.multi_reduction <maximumf>, %11, %cst_14 [1] : vector<4x4xf32> to vector<4xf32>
    %14 = vector.shape_cast %13 : vector<4xf32> to vector<4x1xf32>
    %15 = arith.maximumf %12, %14 : vector<4x1xf32>
    %16 = arith.subf %12, %15 : vector<4x1xf32>
    %17 = math.exp %16 : vector<4x1xf32>
    %18 = vector.broadcast %15 : vector<4x1xf32> to vector<4x4xf32>
    %19 = arith.subf %11, %18 : vector<4x4xf32>
    %20 = math.exp %19 : vector<4x4xf32>
    %c0_15 = arith.constant 0 : index
    %c0_16 = arith.constant 0 : index
    %21 = vector.load %arg9[%c0_15, %c0_16] : memref<4x1xf32, #tpu.memory_space<vmem>>, vector<4x1xf32>
    %22 = arith.mulf %17, %21 : vector<4x1xf32>
    %cst_17 = arith.constant dense<0.000000e+00> : vector<4xf32>
    %23 = vector.multi_reduction <add>, %20, %cst_17 [1] : vector<4x4xf32> to vector<4xf32>
    %24 = vector.shape_cast %23 : vector<4xf32> to vector<4x1xf32>
    %25 = arith.addf %22, %24 : vector<4x1xf32>
    %c0_18 = arith.constant 0 : index
    %c0_19 = arith.constant 0 : index
    %26 = vector.load %arg9[%c0_18, %c0_19] : memref<4x1xf32, #tpu.memory_space<vmem>>, vector<4x1xf32>
    tpu.vector_store %arg9[%c0_18, %c0_19], %25 {strides = array<i32>} : memref<4x1xf32, #tpu.memory_space<vmem>>, vector<4x1xf32>,
    %c0_20 = arith.constant 0 : index
    %c0_21 = arith.constant 0 : index
    %27 = vector.load %arg10[%c0_20, %c0_21] : memref<4x16xf32, #tpu.memory_space<vmem>>, vector<4x16xf32>
    %28 = vector.broadcast %17 : vector<4x1xf32> to vector<4x16xf32>
    %29 = arith.mulf %28, %27 : vector<4x16xf32>
    %30 = arith.mulf %20, %10 : vector<4x4xf32>
    %cst_22 = arith.constant dense<0.000000e+00> : vector<4x16xf32>
    %31 = tpu.matmul %30, %8, %cst_22 {dimension_numbers = #tpu.dot_dimension_numbers<[1], [0], [0], [1], [0, 0, 1, 1], [], []>} : vector<4x4xf32>, vector<4x16xf32>, vector<4x16xf32> -> vector<4x16xf32>
    %32 = arith.addf %29, %31 : vector<4x16xf32>
    %c0_23 = arith.constant 0 : index
    %c0_24 = arith.constant 0 : index
    %33 = vector.load %arg10[%c0_23, %c0_24] : memref<4x16xf32, #tpu.memory_space<vmem>>, vector<4x16xf32>
    tpu.vector_store %arg10[%c0_23, %c0_24], %32 {strides = array<i32>} : memref<4x16xf32, #tpu.memory_space<vmem>>, vector<4x16xf32>,
    %c0_25 = arith.constant 0 : index
    %c0_26 = arith.constant 0 : index
    %34 = vector.load %arg8[%c0_25, %c0_26] : memref<4x1xf32, #tpu.memory_space<vmem>>, vector<4x1xf32>
    tpu.vector_store %arg8[%c0_25, %c0_26], %15 {strides = array<i32>} : memref<4x1xf32, #tpu.memory_space<vmem>>, vector<4x1xf32>,
    %c0_i32_27 = arith.constant 0 : i32
    %35 = arith.cmpi eq, %arg2, %c0_i32_27 : i32
    %36 = arith.extui %35 : i1 to i32
    %c0_i32_28 = arith.constant 0 : i32
    %37 = arith.cmpi ne, %36, %c0_i32_28 : i32
    scf.if %37 {
      %c0_29 = arith.constant 0 : index
      %c0_30 = arith.constant 0 : index
      %38 = vector.load %arg9[%c0_29, %c0_30] : memref<4x1xf32, #tpu.memory_space<vmem>>, vector<4x1xf32>
      %cst_31 = arith.constant 1.000000e+00 : f32
      %39 = vector.broadcast %cst_31 : f32 to vector<4x1xf32>
      %40 = arith.divf %39, %38 : vector<4x1xf32>
      %cst_32 = arith.constant 1.11111116 : f32
      %41 = vector.broadcast %cst_32 : f32 to vector<4x1xf32>
      %42 = arith.mulf %40, %41 : vector<4x1xf32>
      %c0_33 = arith.constant 0 : index
      %c0_34 = arith.constant 0 : index
      %43 = vector.load %arg10[%c0_33, %c0_34] : memref<4x16xf32, #tpu.memory_space<vmem>>, vector<4x16xf32>
      %44 = vector.broadcast %42 : vector<4x1xf32> to vector<4x16xf32>
      %45 = arith.mulf %43, %44 : vector<4x16xf32>
      %c0_35 = arith.constant 0 : index
      %c0_36 = arith.constant 0 : index
      %c0_37 = arith.constant 0 : index
      %46 = vector.load %arg7[%c0_35, %c0_36, %c0_37] : memref<1x4x16xf32, #tpu.memory_space<vmem>>, vector<1x4x16xf32>
      %47 = vector.shape_cast %46 : vector<1x4x16xf32> to vector<4x16xf32>
      %48 = vector.shape_cast %45 : vector<4x16xf32> to vector<1x4x16xf32>
      tpu.vector_store %arg7[%c0_35, %c0_36, %c0_37], %48 {strides = array<i32>} : memref<1x4x16xf32, #tpu.memory_space<vmem>>, vector<1x4x16xf32>,
    } else {
    }
    return
  }
  func.func @transform_0(%arg0: i32, %arg1: i32, %arg2: i32) -> (i32, i32, i32) {
    %c0_i32 = arith.constant 0 : i32
    %c0_i32_0 = arith.constant 0 : i32
    return %arg0, %arg1, %c0_i32 : i32, i32, i32
  }
  func.func @transform_1(%arg0: i32, %arg1: i32, %arg2: i32) -> (i32, i32, i32) {
    %c0_i32 = arith.constant 0 : i32
    %c0_i32_0 = arith.constant 0 : i32
    return %arg0, %arg2, %c0_i32 : i32, i32, i32
  }
  func.func @transform_2(%arg0: i32, %arg1: i32, %arg2: i32) -> (i32, i32, i32) {
    %c0_i32 = arith.constant 0 : i32
    %c0_i32_0 = arith.constant 0 : i32
    return %arg0, %arg2, %c0_i32 : i32, i32, i32
  }
  func.func @transform_3(%arg0: i32, %arg1: i32, %arg2: i32) -> (i32, i32, i32) {
    %c0_i32 = arith.constant 0 : i32
    return %arg0, %arg1, %arg2 : i32, i32, i32
  }
  func.func @transform_4(%arg0: i32, %arg1: i32, %arg2: i32) -> (i32, i32, i32) {
    %c0_i32 = arith.constant 0 : i32
    %c0_i32_0 = arith.constant 0 : i32
    return %arg0, %arg1, %c0_i32 : i32, i32, i32
  }
}

</mosaic_0001>

<llo_original>
// kernel: tpu_custom_call.1
$region0: #{tpu_custom_call.1}
  #allocation0 [shape = 'u32[]', space=smem, size = 0x4, offset = 0x4, fixed_abs, tag = 'smem constant byte address 0x4 - core index']
  #allocation1 [shape = 'u32[72,128]{1,0:T(1,128)}', space=vmem, size = 0x9000, scoped, tag = 'internal scratch']
  #allocation2 [shape = 'f32[4,1]{1,0:T(4,128)}', space=vmem, size = 0x800, scoped, tag = 'scratch operand']
  #allocation3 [shape = 'f32[4,1]{1,0:T(4,128)}', space=vmem, size = 0x800, scoped, tag = 'scratch operand']
  #allocation4 [shape = 'f32[4,16]{1,0:T(4,128)}', space=vmem, size = 0x800, scoped, tag = 'scratch operand']
  %s0 = inlined_call_operand.hbm [shape: f32[2,4,8], index: 0, kind: input, shape index: {}]
  %s1 = inlined_call_operand.hbm [shape: f32[2,4,8], index: 1, kind: input, shape index: {}]
  %s2 = inlined_call_operand.hbm [shape: f32[2,4,16], index: 2, kind: input, shape index: {}]
  %s3 = inlined_call_operand.hbm [shape: f32[2,4,4], index: 3, kind: input, shape index: {}]
  %s4 = inlined_call_operand.hbm [shape: f32[2,4,16], index: 4, kind: output, shape index: {}]
  %s5 = sld [smem:[#allocation0]]
  $region73: #{tpu_custom_call.1} parent=0
    _
  %s7 = ssub.s32 1, %s5
  %s8 = scalar_select 0, %s7, %s5
  $region1: #{tpu_custom_call.1} parent=0
    #allocation5 [shape = 'u8[4096]{0}', space=vmem, size = 0x1000, scoped, tag = 'input window, operand 0']
    #allocation6 [shape = 's32[2]{0}', space=sflag, size = 0x8, scoped, tag = 'scoped memory for tpu_custom_call.1']
    #allocation7 [shape = 's32[2]{0}', space=sflag, size = 0x8, scoped, tag = 'scoped memory for tpu_custom_call.1']
    #allocation8 [shape = 'u8[4096]{0}', space=vmem, size = 0x1000, scoped, tag = 'input window, operand 1']
    #allocation9 [shape = 's32[2]{0}', space=sflag, size = 0x8, scoped, tag = 'scoped memory for tpu_custom_call.1']
    #allocation10 [shape = 'u8[4096]{0}', space=vmem, size = 0x1000, scoped, tag = 'input window, operand 2']
    #allocation11 [shape = 'u8[4096]{0}', space=vmem, size = 0x1000, scoped, tag = 'input window, operand 3']
    #allocation12 [shape = 's32[2]{0}', space=sflag, size = 0x8, scoped, tag = 'scoped memory for tpu_custom_call.1']
    #allocation13 [shape = 'u8[4096]{0}', space=vmem, size = 0x1000, scoped, tag = 'output window, operand 0']
    %9 = vsyncpa [#allocation6], 0
    %s10 = scalar_lea.sflag [#allocation6], 1
    %11 = vsyncpa %s10, 0
    %12 = vsyncpa [#allocation9], 0
    %s13 = scalar_lea.sflag [#allocation9], 1
    %14 = vsyncpa %s13, 0
    %15 = vsyncpa [#allocation12], 0
    %s16 = scalar_lea.sflag [#allocation12], 1
    %17 = vsyncpa %s16, 0
    %18 = vsyncpa [#allocation7], 0
    %s19 = scalar_lea.sflag [#allocation7], 1
    %20 = vsyncpa %s19, 0
    loop: start=0, step=1, limit=4
    $region2: #{tpu_custom_call.1} parent=1 // loop_pre_header
      _
    $region3: #{tpu_custom_call.1} parent=1 // loop_header
      %s22 = sphi 0, %s26
      %p23 = scmp.ge.s32.totalorder %s22, 4
      %s29 = sphi 0, %s48
      %s30 = sphi 0, %s44
      %s31 = sphi 0, %s40
      %s32 = sphi 0, %s29
      %s33 = sphi 0, %s30
      %s34 = sphi 0, %s31
      %s35 = sphi 0, %s32
      %s36 = sphi 0, %s33
      %s37 = sphi 0, %s34
      %s53 = sphi 0, %s55
      %s56 = sphi 0, %s53
      %s57 = sphi 0, %s56
      %s73 = sphi 0, %s57
      %s81 = sphi 0, %s83
      %s84 = sphi 0, %s81
      %s85 = sphi 0, %s84
      %s101 = sphi 0, %s85
      %s109 = sphi 0, %s111
      %s112 = sphi 0, %s109
      %s113 = sphi 0, %s112
      %s129 = sphi 0, %s113
      %s139 = sphi 0, %s141
      %s142 = sphi 0, %s139
      %s143 = sphi 0, %s142
      %s159 = sphi 0, %s143
      %s167 = sphi 0, %s169
      %s170 = sphi 0, %s167
      %s171 = sphi 0, %s170
      %s187 = sphi 0, %s171
    $region4: #{tpu_custom_call.1} parent=1 // loop_header_branch
      %25 = sbr.rel (%p23) target = $region8
    $region5: #{tpu_custom_call.1} parent=1 // loop_body
      %s27 = ssub.s32 %s22, 1
      %s28 = ssub.s32 %s22, 2
      %s38 = sadd.s32 1, %s31
      %p39 = scmp.ge.s32.totalorder %s38, 1
      %s40 = scalar_select %p39, 0, %s38
      %s41 = sadd.s32 1, %s30
      %s42 = scalar_select %p39, %s41, %s30
      %p43 = scmp.ge.s32.totalorder %s42, 1
      %s44 = scalar_select %p43, 0, %s42
      %s45 = sadd.s32 1, %s29
      %s46 = scalar_select %p43, %s45, %s29
      %p47 = scmp.ge.s32.totalorder %s46, 2
      %s48 = scalar_select %p47, 0, %s46
      %s49 = ssub.s32 %s29, %s48
      %s50 = ssub.s32 %s30, %s44
      %s51 = sor.u32 %s49, %s50
      %p52 = scmp.eq.s32.totalorder %s51, 0
      %s54 = sadd.s32 %s53, 1
      %s55 = scalar_select %p52, %s53, %s54
      %p58 = pneg %p52
      %p59 = scmp.eq.s32.totalorder %s22, 1
      %p60 = por %p58, %p59
      %p61 = scmp.ne.s32.totalorder %s53, %s56
      %p62 = scmp.eq.s32.totalorder %s22, 0
      %p63 = por %p61, %p62
      %p64 = scmp.ne.s32.totalorder %s53, %s56
      %p65 = scmp.eq.s32.totalorder %s27, 1
      %p66 = por %p64, %p65
      %p67 = scmp.ne.s32.totalorder %s56, %s57
      %p68 = scmp.eq.s32.totalorder %s27, 0
      %p69 = por %p67, %p68
      %p70 = scmp.ne.s32.totalorder %s56, %s57
      %p71 = scmp.eq.s32.totalorder %s28, 1
      %p72 = por %p70, %p71
      %p74 = scmp.ne.s32.totalorder %s57, %s73
      %p75 = scmp.eq.s32.totalorder %s28, 0
      %p76 = por %p74, %p75
      %s77 = ssub.s32 %s29, %s48
      %s78 = ssub.s32 %s31, %s40
      %s79 = sor.u32 %s77, %s78
      %p80 = scmp.eq.s32.totalorder %s79, 0
      %s82 = sadd.s32 %s81, 1
      %s83 = scalar_select %p80, %s81, %s82
      %p86 = pneg %p80
      %p87 = scmp.eq.s32.totalorder %s22, 1
      %p88 = por %p86, %p87
      %p89 = scmp.ne.s32.totalorder %s81, %s84
      %p90 = scmp.eq.s32.totalorder %s22, 0
      %p91 = por %p89, %p90
      %p92 = scmp.ne.s32.totalorder %s81, %s84
      %p93 = scmp.eq.s32.totalorder %s27, 1
      %p94 = por %p92, %p93
      %p95 = scmp.ne.s32.totalorder %s84, %s85
      %p96 = scmp.eq.s32.totalorder %s27, 0
      %p97 = por %p95, %p96
      %p98 = scmp.ne.s32.totalorder %s84, %s85
      %p99 = scmp.eq.s32.totalorder %s28, 1
      %p100 = por %p98, %p99
      %p102 = scmp.ne.s32.totalorder %s85, %s101
      %p103 = scmp.eq.s32.totalorder %s28, 0
      %p104 = por %p102, %p103
      %s105 = ssub.s32 %s29, %s48
      %s106 = ssub.s32 %s31, %s40
      %s107 = sor.u32 %s105, %s106
      %p108 = scmp.eq.s32.totalorder %s107, 0
      %s110 = sadd.s32 %s109, 1
      %s111 = scalar_select %p108, %s109, %s110
      %p114 = pneg %p108
      %p115 = scmp.eq.s32.totalorder %s22, 1
      %p116 = por %p114, %p115
      %p117 = scmp.ne.s32.totalorder %s109, %s112
      %p118 = scmp.eq.s32.totalorder %s22, 0
      %p119 = por %p117, %p118
      %p120 = scmp.ne.s32.totalorder %s109, %s112
      %p121 = scmp.eq.s32.totalorder %s27, 1
      %p122 = por %p120, %p121
      %p123 = scmp.ne.s32.totalorder %s112, %s113
      %p124 = scmp.eq.s32.totalorder %s27, 0
      %p125 = por %p123, %p124
      %p126 = scmp.ne.s32.totalorder %s112, %s113
      %p127 = scmp.eq.s32.totalorder %s28, 1
      %p128 = por %p126, %p127
      %p130 = scmp.ne.s32.totalorder %s113, %s129
      %p131 = scmp.eq.s32.totalorder %s28, 0
      %p132 = por %p130, %p131
      %s133 = ssub.s32 %s29, %s48
      %s134 = ssub.s32 %s30, %s44
      %s135 = sor.u32 %s133, %s134
      %s136 = ssub.s32 %s31, %s40
      %s137 = sor.u32 %s135, %s136
      %p138 = scmp.eq.s32.totalorder %s137, 0
      %s140 = sadd.s32 %s139, 1
      %s141 = scalar_select %p138, %s139, %s140
      %p144 = pneg %p138
      %p145 = scmp.eq.s32.totalorder %s22, 1
      %p146 = por %p144, %p145
      %p147 = scmp.ne.s32.totalorder %s139, %s142
      %p148 = scmp.eq.s32.totalorder %s22, 0
      %p149 = por %p147, %p148
      %p150 = scmp.ne.s32.totalorder %s139, %s142
      %p151 = scmp.eq.s32.totalorder %s27, 1
      %p152 = por %p150, %p151
      %p153 = scmp.ne.s32.totalorder %s142, %s143
      %p154 = scmp.eq.s32.totalorder %s27, 0
      %p155 = por %p153, %p154
      %p156 = scmp.ne.s32.totalorder %s142, %s143
      %p157 = scmp.eq.s32.totalorder %s28, 1
      %p158 = por %p156, %p157
      %p160 = scmp.ne.s32.totalorder %s143, %s159
      %p161 = scmp.eq.s32.totalorder %s28, 0
      %p162 = por %p160, %p161
      %s163 = ssub.s32 %s29, %s48
      %s164 = ssub.s32 %s30, %s44
      %s165 = sor.u32 %s163, %s164
      %p166 = scmp.eq.s32.totalorder %s165, 0
      %s168 = sadd.s32 %s167, 1
      %s169 = scalar_select %p166, %s167, %s168
      %p172 = pneg %p166
      %p173 = scmp.eq.s32.totalorder %s22, 1
      %p174 = por %p172, %p173
      %p175 = scmp.ne.s32.totalorder %s167, %s170
      %p176 = scmp.eq.s32.totalorder %s22, 0
      %p177 = por %p175, %p176
      %p178 = scmp.ne.s32.totalorder %s167, %s170
      %p179 = scmp.eq.s32.totalorder %s27, 1
      %p180 = por %p178, %p179
      %p181 = scmp.ne.s32.totalorder %s170, %s171
      %p182 = scmp.eq.s32.totalorder %s27, 0
      %p183 = por %p181, %p182
      %p184 = scmp.ne.s32.totalorder %s170, %s171
      %p185 = scmp.eq.s32.totalorder %s28, 1
      %p186 = por %p184, %p185
      %p188 = scmp.ne.s32.totalorder %s171, %s187
      %p189 = scmp.eq.s32.totalorder %s28, 0
      %p190 = por %p188, %p189
      %p191 = scmp.le.s32.totalorder 1, %s22
      %p192 = scmp.lt.s32.totalorder %s22, 3
      %p193 = pnand %p191, %p192
      %p194 = pneg %p193
      // Predicated region
      $region9: #{tpu_custom_call.1} parent=5 // pred_check
        _
      $region10: #{tpu_custom_call.1} parent=5 // pred_check_branch
        %196 = sbr.rel (%p193) target = $region12
      $region11: #{tpu_custom_call.1} parent=5 // pred_region
        %s197 = ssub.s32 %s22, 1
      $region12: #{tpu_custom_call.1} parent=5 // pred_fallthru
        _
      %p198 = scmp.lt.s32.totalorder %s22, 2
      // Predicated region
      $region13: #{tpu_custom_call.1} parent=5 // pred_check
        %p199 = pneg %p198
      $region14: #{tpu_custom_call.1} parent=5 // pred_check_branch
        %201 = sbr.rel (%p199) target = $region16
      $region15: #{tpu_custom_call.1} parent=5 // pred_region
        // Predicated region
        $region17: #{tpu_custom_call.1} parent=15 // pred_check
          %p202 = pneg %p63
        $region18: #{tpu_custom_call.1} parent=15 // pred_check_branch
          %204 = sbr.rel (%p202) target = $region20
        $region19: #{tpu_custom_call.1} parent=15 // pred_region
          %s205 = sand.u32 %s53, 1
          %s206 = scalar_lea.sflag [#allocation6], %s205
          %s207 = sand.u32 %s53, 1
          %s208 = smul.addr %s207, 4
          %s209 = scalar_lea.vmem [#allocation5], %s208
          %211 = vsyncadd %s206, 0
          %s212 = sadd.s32 %s30, %s29
          %s213 = smul.addr %s212, 4
          %s214 = scalar_lea.hbm %s0, %s213
          %s216 = sshll.u32 %s214, 4
          %s217 = int_to_ptr.hbm [resolvable:$true] %s216
          %s218 = sshll.u32 %s209, 4
          %s219 = int_to_ptr.vmem [resolvable:$true] %s218
          %221 = dma.hbm_to_vmem [thread:$0]  %s217, 64, %s219, %s206
        $region20: #{tpu_custom_call.1} parent=15 // pred_fallthru
          _
        // Predicated region
        $region21: #{tpu_custom_call.1} parent=15 // pred_check
          %p222 = pneg %p91
        $region22: #{tpu_custom_call.1} parent=15 // pred_check_branch
          %224 = sbr.rel (%p222) target = $region24
        $region23: #{tpu_custom_call.1} parent=15 // pred_region
          %s225 = sand.u32 %s22, 1
          %s226 = scalar_lea.sflag [#allocation9], %s225
          %s227 = sand.u32 %s81, 1
          %s228 = smul.addr %s227, 4
          %s229 = scalar_lea.vmem [#allocation8], %s228
          %231 = vsyncadd %s226, 0
          %s232 = sadd.s32 %s31, %s29
          %s233 = smul.addr %s232, 4
          %s234 = scalar_lea.hbm %s1, %s233
          %s236 = sshll.u32 %s234, 4
          %s237 = int_to_ptr.hbm [resolvable:$true] %s236
          %s238 = sshll.u32 %s229, 4
          %s239 = int_to_ptr.vmem [resolvable:$true] %s238
          %241 = dma.hbm_to_vmem [thread:$0]  %s237, 64, %s239, %s226
        $region24: #{tpu_custom_call.1} parent=15 // pred_fallthru
          _
        // Predicated region
        $region25: #{tpu_custom_call.1} parent=15 // pred_check
          %p242 = pneg %p119
        $region26: #{tpu_custom_call.1} parent=15 // pred_check_branch
          %244 = sbr.rel (%p242) target = $region28
        $region27: #{tpu_custom_call.1} parent=15 // pred_region
          %s245 = sand.u32 %s22, 1
          %s246 = scalar_lea.sflag [#allocation9], %s245
          %s247 = sand.u32 %s109, 1
          %s248 = smul.addr %s247, 4
          %s249 = scalar_lea.vmem [#allocation10], %s248
          %251 = vsyncadd %s246, 0
          %s252 = sadd.s32 %s31, %s29
          %s253 = smul.addr %s252, 4
          %s254 = scalar_lea.hbm %s2, %s253
          %s256 = sshll.u32 %s254, 4
          %s257 = int_to_ptr.hbm [resolvable:$true] %s256
          %s258 = sshll.u32 %s249, 4
          %s259 = int_to_ptr.vmem [resolvable:$true] %s258
          %261 = dma.hbm_to_vmem [thread:$0]  %s257, 64, %s259, %s246
        $region28: #{tpu_custom_call.1} parent=15 // pred_fallthru
          _
        // Predicated region
        $region29: #{tpu_custom_call.1} parent=15 // pred_check
          %p262 = pneg %p149
        $region30: #{tpu_custom_call.1} parent=15 // pred_check_branch
          %264 = sbr.rel (%p262) target = $region32
        $region31: #{tpu_custom_call.1} parent=15 // pred_region
          %s265 = sand.u32 %s139, 1
          %s266 = scalar_lea.sflag [#allocation12], %s265
          %s267 = sand.u32 %s139, 1
          %s268 = smul.addr %s267, 4
          %s269 = scalar_lea.vmem [#allocation11], %s268
          %271 = vsyncadd %s266, 0
          %s272 = sadd.s32 %s31, %s30
          %s273 = sadd.s32 %s272, %s29
          %s274 = smul.addr %s273, 4
          %s275 = scalar_lea.hbm %s3, %s274
          %s277 = sshll.u32 %s275, 4
          %s278 = int_to_ptr.hbm [resolvable:$true] %s277
          %s279 = sshll.u32 %s269, 4
          %s280 = int_to_ptr.vmem [resolvable:$true] %s279
          %282 = dma.hbm_to_vmem [thread:$0]  %s278, 64, %s280, %s266
        $region32: #{tpu_custom_call.1} parent=15 // pred_fallthru
          _
      $region16: #{tpu_custom_call.1} parent=5 // pred_fallthru
        _
      %p283 = scmp.le.s32.totalorder 1, %s22
      %p284 = scmp.lt.s32.totalorder %s22, 3
      %p285 = pnand %p283, %p284
      %p286 = pneg %p285
      // Predicated region
      $region33: #{tpu_custom_call.1} parent=5 // pred_check
        _
      $region34: #{tpu_custom_call.1} parent=5 // pred_check_branch
        %288 = sbr.rel (%p285) target = $region36
      $region35: #{tpu_custom_call.1} parent=5 // pred_region
        %s289 = ssub.s32 %s22, 1
        %s290 = sand.u32 %s56, 1
        %s291 = scalar_lea.sflag [#allocation6], %s290
        %s292 = sand.u32 %s56, 1
        %s293 = smul.addr %s292, 4
        %s294 = scalar_lea.vmem [#allocation5], %s293
        // Predicated region
        $region37: #{tpu_custom_call.1} parent=35 // pred_check
          %p295 = pneg %p69
        $region38: #{tpu_custom_call.1} parent=35 // pred_check_branch
          %297 = sbr.rel (%p295) target = $region40
        $region39: #{tpu_custom_call.1} parent=35 // pred_region
          %299 = dma.done %s291, 64
        $region40: #{tpu_custom_call.1} parent=35 // pred_fallthru
          _
        %s300 = sand.u32 %s27, 1
        %s301 = scalar_lea.sflag [#allocation9], %s300
        %s302 = sand.u32 %s84, 1
        %s303 = smul.addr %s302, 4
        %s304 = scalar_lea.vmem [#allocation8], %s303
        // Predicated region
        $region41: #{tpu_custom_call.1} parent=35 // pred_check
          %p305 = pneg %p97
        $region42: #{tpu_custom_call.1} parent=35 // pred_check_branch
          %307 = sbr.rel (%p305) target = $region44
        $region43: #{tpu_custom_call.1} parent=35 // pred_region
          %309 = dma.done %s301, 64
        $region44: #{tpu_custom_call.1} parent=35 // pred_fallthru
          _
        %s310 = sand.u32 %s27, 1
        %s311 = scalar_lea.sflag [#allocation9], %s310
        %s312 = sand.u32 %s112, 1
        %s313 = smul.addr %s312, 4
        %s314 = scalar_lea.vmem [#allocation10], %s313
        // Predicated region
        $region45: #{tpu_custom_call.1} parent=35 // pred_check
          %p315 = pneg %p125
        $region46: #{tpu_custom_call.1} parent=35 // pred_check_branch
          %317 = sbr.rel (%p315) target = $region48
        $region47: #{tpu_custom_call.1} parent=35 // pred_region
          %319 = dma.done %s311, 64
        $region48: #{tpu_custom_call.1} parent=35 // pred_fallthru
          _
        %s320 = sand.u32 %s142, 1
        %s321 = scalar_lea.sflag [#allocation12], %s320
        %s322 = sand.u32 %s142, 1
        %s323 = smul.addr %s322, 4
        %s324 = scalar_lea.vmem [#allocation11], %s323
        // Predicated region
        $region49: #{tpu_custom_call.1} parent=35 // pred_check
          %p325 = pneg %p155
        $region50: #{tpu_custom_call.1} parent=35 // pred_check_branch
          %327 = sbr.rel (%p325) target = $region52
        $region51: #{tpu_custom_call.1} parent=35 // pred_region
          %329 = dma.done %s321, 64
        $region52: #{tpu_custom_call.1} parent=35 // pred_fallthru
          _
        %s330 = sand.u32 %s56, 1
        %s331 = scalar_lea.sflag [#allocation6], %s330
        %s332 = sand.u32 %s56, 1
        %s333 = smul.addr %s332, 4
        %s334 = scalar_lea.vmem [#allocation5], %s333
        %p335 = pneg %p69
        %p336 = pneg %p66
        %s337 = sand.u32 %s27, 1
        %s338 = scalar_lea.sflag [#allocation9], %s337
        %s339 = sand.u32 %s84, 1
        %s340 = smul.addr %s339, 4
        %s341 = scalar_lea.vmem [#allocation8], %s340
        %p342 = pneg %p97
        %p343 = pneg %p94
        %s344 = sand.u32 %s27, 1
        %s345 = scalar_lea.sflag [#allocation9], %s344
        %s346 = sand.u32 %s112, 1
        %s347 = smul.addr %s346, 4
        %s348 = scalar_lea.vmem [#allocation10], %s347
        %p349 = pneg %p125
        %p350 = pneg %p122
        %s351 = sand.u32 %s142, 1
        %s352 = scalar_lea.sflag [#allocation12], %s351
        %s353 = sand.u32 %s142, 1
        %s354 = smul.addr %s353, 4
        %s355 = scalar_lea.vmem [#allocation11], %s354
        %p356 = pneg %p155
        %p357 = pneg %p152
        %p358 = pneg %p183
        %p359 = pneg %p180
        %s360 = sand.u32 %s170, 1
        %s361 = scalar_lea.sflag [#allocation7], %s360
        %s362 = sand.u32 %s170, 1
        %s363 = smul.addr %s362, 4
        %s364 = scalar_lea.vmem [#allocation13], %s363
        %p365 = scmp.eq.s32.totalorder %s34, 0
        // Predicated region
        $region53: #{tpu_custom_call.1} parent=35 // pred_check
          %p366 = pneg %p365
        $region54: #{tpu_custom_call.1} parent=35 // pred_check_branch
          %368 = sbr.rel (%p366) target = $region56
        $region55: #{tpu_custom_call.1} parent=35 // pred_region
          %vm369 = vcmask 3072
          %370 = vst.msk [vmem:[#allocation2] sm:$0xf] %vm369, -inf
          %371 = vst.msk [vmem:[#allocation3] sm:$0xf] %vm369, 0.0
          %vm372 = vcmask 125952
          %373 = vst.msk [vmem:[#allocation4] sm:$0xf] %vm372, 0.0
        $region56: #{tpu_custom_call.1} parent=35 // pred_fallthru
          _
        %v374 = vld [vmem:[%s294] sm:$0xf]
        %v375 = vld [vmem:[%s304] sm:$0xf]
        %v376 = vld [vmem:[%s314] sm:$0xf]
        %v377 = vld [vmem:[%s324] sm:$0xf]
        %vm378 = vcmask 64512
        %v380 = vsel %vm378, %v374, 0
        %v383 = vsel %vm378, %v375, 0
        %385 = vmatpush.xpose.msra.mxu0 0.0
        %386 = vmatpush.xpose.msra.mxu0 0.0
        %387 = vmatpush.xpose.msra.mxu0 0.0
        %388 = vmatpush.xpose.msra.mxu0 0.0
        %389 = vmatpush.xpose.msra.mxu0 0.0
        %390 = vmatpush.xpose.msra.mxu0 0.0
        %391 = vmatpush.xpose.msra.mxu0 0.0
        %392 = vmatpush.xpose.msra.mxu0 0.0
        %393 = vmatpush.xpose.msra.mxu0 0.0
        %394 = vmatpush.xpose.msra.mxu0 0.0
        %395 = vmatpush.xpose.msra.mxu0 0.0
        %396 = vmatpush.xpose.msra.mxu0 0.0
        %397 = vmatpush.xpose.msra.mxu0 0.0
        %398 = vmatpush.xpose.msra.mxu0 0.0
        %399 = vmatpush.xpose.msra.mxu0 0.0
        %400 = vmatpush.xpose.msra.mxu0 %v383
        %401 = vmatmul.f32.gmra.mxu0 %v380
        %v402 = vpop.f32.mrf.mxu0
        %v403 = vadd.f32 0.0, %v402
        %404 = vdwg.mxu0
        %v405 = vld [vmem:[#allocation2] sm:$0xf]
        %vm406 = vcmask 27648
        %v407 = vsel %vm406, %v403, -inf
        %408 = vmax.xlane.f32.xlu0 %v407
        %v409 = vpop.xlane.xlu0 %408
        %v410 = vmax.f32 %v405, %v409
        %v411 = vsub.f32 %v405, %v410
        %v412 = vmul.f32 %v411, 1.442695
        %v413 = vpow.pop %v412
        %415 = vset.pattern.permute.xlu0 0
        %416 = vperm.xlu0 %415, %v410
        %v417 = vpop.permute.xlu0 %416
        %v419 = vsub.f32 %v403, %v417
        %v420 = vmul.f32 %v419, 1.442695
        %v421 = vpow.pop %v420
        %v422 = vld [vmem:[#allocation3] sm:$0xf]
        %v423 = vmul.f32 %v413, %v422
        %v424 = vsel %vm406, %v421, 0.0
        %425 = vadd.xlane.f32.xlu0 %v424
        %v426 = vpop.xlane.xlu0 %425
        %v427 = vadd.f32 %v423, %v426
        %vm428 = vcmask 3072
        %429 = vst.msk [vmem:[#allocation3] sm:$0xf] %vm428, %v427
        %v430 = vld [vmem:[#allocation4] sm:$0xf]
        %432 = vset.pattern.permute.xlu0 0
        %433 = vperm.xlu0 %432, %v413
        %v434 = vpop.permute.xlu0 %433
        %v436 = vmul.f32 %v434, %v430
        %v437 = vmul.f32 %v421, %v377
        %vm438 = vcmask 31744
        %v440 = vsel %vm438, %v437, 0
        %vm442 = vcmask 1043456
        %v444 = vsel %vm442, %v376, 0
        %446 = vmatpush.msra.mxu0 0.0
        %447 = vmatpush.msra.mxu0 0.0
        %448 = vmatpush.msra.mxu0 0.0
        %449 = vmatpush.msra.mxu0 0.0
        %450 = vmatpush.msra.mxu0 0.0
        %451 = vmatpush.msra.mxu0 0.0
        %452 = vmatpush.msra.mxu0 0.0
        %453 = vmatpush.msra.mxu0 0.0
        %454 = vmatpush.msra.mxu0 0.0
        %455 = vmatpush.msra.mxu0 0.0
        %456 = vmatpush.msra.mxu0 0.0
        %457 = vmatpush.msra.mxu0 0.0
        %458 = vmatpush.msra.mxu0 0.0
        %459 = vmatpush.msra.mxu0 0.0
        %460 = vmatpush.msra.mxu0 0.0
        %461 = vmatpush.msra.mxu0 %v444
        %462 = vmatmul.f32.gmra.mxu0 %v440
        %v463 = vpop.f32.mrf.mxu0
        %v464 = vadd.f32 0.0, %v463
        %465 = vdwg.mxu0
        %v466 = vadd.f32 %v436, %v464
        %vm467 = vcmask 125952
        %468 = vst.msk [vmem:[#allocation4] sm:$0xf] %vm467, %v466
        %469 = vst.msk [vmem:[#allocation2] sm:$0xf] %vm428, %v410
        // Predicated region
        $region57: #{tpu_custom_call.1} parent=35 // pred_check
          %p470 = pneg %p365
        $region58: #{tpu_custom_call.1} parent=35 // pred_check_branch
          %472 = sbr.rel (%p470) target = $region60
        $region59: #{tpu_custom_call.1} parent=35 // pred_region
          %v473 = vld [vmem:[#allocation3] sm:$0xf]
          %v474 = vrcp.pop %v473
          %v475 = vmul.f32 %v473, %v474
          %v476 = vsub.f32 1.0, %v475
          %v477 = vmul.f32 %v474, %v476
          %v478 = vadd.f32 %v474, %v477
          %vm479 = vweird.f32 %v473
          %vm480 = vweird.f32 %v474
          %vm481 = vmor %vm479, %vm480
          %v482 = vsel %vm481, %v474, %v478
          %v483 = vand.u32 2147483647, %v473
          %vm484 = vcmp.eq.f32.partialorder %v483, 8.507059e+37
          %v485 = vand.u32 %v473, 2147483648
          %v486 = vor.u32 1.1754944e-38, %v485
          %v487 = vsel %vm484, %v486, %v482
          %v488 = vmul.f32 1.0, %v487
          %v489 = vmul.f32 %v488, 1.1111112
          %v490 = vld [vmem:[#allocation4] sm:$0xf]
          %492 = vset.pattern.permute.xlu0 0
          %493 = vperm.xlu0 %492, %v489
          %v494 = vpop.permute.xlu0 %493
          %v496 = vmul.f32 %v490, %v494
          %497 = vst.msk [vmem:[%s364] sm:$0xf] %vm467, %v496
        $region60: #{tpu_custom_call.1} parent=35 // pred_fallthru
          _
        %s498 = sand.u32 %s170, 1
        %s499 = scalar_lea.sflag [#allocation7], %s498
        %s500 = sand.u32 %s170, 1
        %s501 = smul.addr %s500, 4
        %s502 = scalar_lea.vmem [#allocation13], %s501
        // Predicated region
        $region61: #{tpu_custom_call.1} parent=35 // pred_check
          %p503 = pneg %p180
        $region62: #{tpu_custom_call.1} parent=35 // pred_check_branch
          %505 = sbr.rel (%p503) target = $region64
        $region63: #{tpu_custom_call.1} parent=35 // pred_region
          %507 = vsyncadd %s499, 0
          %s508 = sadd.s32 %s33, %s32
          %s509 = smul.addr %s508, 4
          %s510 = scalar_lea.hbm %s4, %s509
          %s512 = sshll.u32 %s502, 4
          %s513 = int_to_ptr.vmem [resolvable:$true] %s512
          %s514 = sshll.u32 %s510, 4
          %s515 = int_to_ptr.hbm [resolvable:$true] %s514
          %517 = dma.vmem_to_hbm [thread:$0]  %s513, 64, %s515, %s499
        $region64: #{tpu_custom_call.1} parent=35 // pred_fallthru
          _
      $region36: #{tpu_custom_call.1} parent=5 // pred_fallthru
        _
      %p518 = scmp.le.s32.totalorder 2, %s22
      // Predicated region
      $region65: #{tpu_custom_call.1} parent=5 // pred_check
        %p519 = pneg %p518
      $region66: #{tpu_custom_call.1} parent=5 // pred_check_branch
        %521 = sbr.rel (%p519) target = $region68
      $region67: #{tpu_custom_call.1} parent=5 // pred_region
        %s522 = ssub.s32 %s22, 2
        // Predicated region
        $region69: #{tpu_custom_call.1} parent=67 // pred_check
          %p523 = pneg %p186
        $region70: #{tpu_custom_call.1} parent=67 // pred_check_branch
          %525 = sbr.rel (%p523) target = $region72
        $region71: #{tpu_custom_call.1} parent=67 // pred_region
          %s526 = sand.u32 %s171, 1
          %s527 = scalar_lea.sflag [#allocation7], %s526
          %s528 = sand.u32 %s171, 1
          %s529 = smul.addr %s528, 4
          %s530 = scalar_lea.vmem [#allocation13], %s529
          %532 = dma.done %s527, 64
        $region72: #{tpu_custom_call.1} parent=67 // pred_fallthru
          _
      $region68: #{tpu_custom_call.1} parent=5 // pred_fallthru
        _
    $region6: #{tpu_custom_call.1} parent=1 // loop_footer
      %s26 = sadd.s32 1, %s22
    $region7: #{tpu_custom_call.1} parent=1 // loop_footer_branch
      %21 = sbr.rel target = $region3
    $region8: #{tpu_custom_call.1} parent=1 // loop_exit
      _
    %533 = vsyncpa [#allocation6], 1
    %s534 = scalar_lea.sflag [#allocation6], 1
    %535 = vsyncpa %s534, 1
    %536 = vsyncpa [#allocation9], 1
    %s537 = scalar_lea.sflag [#allocation9], 1
    %538 = vsyncpa %s537, 1
    %539 = vsyncpa [#allocation12], 1
    %s540 = scalar_lea.sflag [#allocation12], 1
    %541 = vsyncpa %s540, 1
    %542 = vsyncpa [#allocation7], 1
    %s543 = scalar_lea.sflag [#allocation7], 1
    %544 = vsyncpa %s543, 1

</llo_original>
